<compile_context>
chip_gen: v7x
topology: tpu7x:2x2x1
jax: 0.10.0
libtpu: 0.0.40
codegen_flags: <defaults>
</compile_context>

<pallas_src>
import jax
import jax.numpy as jnp
from jax.experimental import pallas as pl
from jax.experimental.pallas import tpu as pltpu

STATE_DIM = 3
ACTION_DIM = 4
HIDDEN = 64


def policy_mlp_kernel(x_ref, w1_ref, b1_ref, w2_ref, b2_ref, w3_ref, b3_ref,
                      o_ref):
    """Fused transposed MLP forward on one batch-lane tile.

    x_ref:  [STATE_DIM,  TB]  f32   (batch on lanes)
    w1_ref: [HIDDEN, STATE_DIM] f32     b1_ref: [HIDDEN, 1]     f32
    w2_ref: [HIDDEN, HIDDEN]   f32/bf16 b2_ref: [HIDDEN, 1]     f32
    w3_ref: [ACTION_DIM, HIDDEN] f32/bf16 b3_ref: [ACTION_DIM, 1] f32
    o_ref:  [ACTION_DIM, TB]  f32
    """
    x = x_ref[...]                                     # [S, TB]
    w1 = w1_ref[...]                                   # [H, S]

    # Layer 1: K=3 contraction as three VPU broadcast-FMAs (outer products);
    # 3/128 MXU systolic-depth utilization would be pure loss here.
    h = b1_ref[...]                                    # [H, 1]
    for k in range(STATE_DIM):                         # static unroll (3 FMAs)
        h = h + w1[:, k:k + 1] * x[k:k + 1, :]         # [H,1]*[1,TB] -> [H,TB]
    h = jnp.maximum(h, 0.0)

    # Layers 2/3 on the MXU; operands match the (possibly bf16) weight dtype,
    # accumulation stays f32.
    mxu_dt = w2_ref.dtype
    h = jnp.dot(w2_ref[...], h.astype(mxu_dt),
                preferred_element_type=jnp.float32)
    h = jnp.maximum(h + b2_ref[...], 0.0)

    out = jnp.dot(w3_ref[...], h.astype(mxu_dt),
                  preferred_element_type=jnp.float32)
    o_ref[...] = (out + b3_ref[...]).astype(o_ref.dtype)


def policy_network_forward_t(x_t, prepped, *, block_b=8192):
    """Core entry point: x_t [STATE_DIM, B] -> logits_t [ACTION_DIM, B].

    No relayouts: batch stays on the lane axis the whole way.  block_b must be
    a multiple of 128 (default 8192 ≈ 0.45 MiB double-buffered x/out traffic
    per step, far under scoped VMEM on v5e/v6e/v7x).
    """
    x_t = x_t.astype(jnp.float32)
    _, B = x_t.shape
    w1, b1, w2, b2, w3, b3 = prepped

    # Lane tile: power-of-two bucket of B (>=128), capped at block_b.  The
    # tile depends only on the bucket, not on B itself, so the set of compiled
    # kernel variants stays small; Pallas clips the ragged boundary block so
    # no jnp.pad copy of x is needed.
    tb = min(max(128, pl.next_power_of_2(B)), block_b)
    grid = (pl.cdiv(B, tb),)

    return pl.pallas_call(
        policy_mlp_kernel,
        out_shape=jax.ShapeDtypeStruct((ACTION_DIM, B), jnp.float32),
        grid=grid,
        in_specs=[
            # x_T streams per lane tile (double-buffered by the pipeline).
            pl.BlockSpec((STATE_DIM, tb), lambda i: (0, i)),
            # Weights/biases: constant index maps -> DMA'd once, VMEM-resident.
            pl.BlockSpec((HIDDEN, STATE_DIM), lambda i: (0, 0)),
            pl.BlockSpec((HIDDEN, 1), lambda i: (0, 0)),
            pl.BlockSpec((HIDDEN, HIDDEN), lambda i: (0, 0)),
            pl.BlockSpec((HIDDEN, 1), lambda i: (0, 0)),
            pl.BlockSpec((ACTION_DIM, HIDDEN), lambda i: (0, 0)),
            pl.BlockSpec((ACTION_DIM, 1), lambda i: (0, 0)),
        ],
        out_specs=pl.BlockSpec((ACTION_DIM, tb), lambda i: (0, i)),
        compiler_params=pltpu.CompilerParams(
            dimension_semantics=("parallel",)),
    )(x_t, w1, b1, w2, b2, w3, b3)


def policy_network_forward(x, prepped, *, block_b=8192):
    """PyTorch-style adapter: x [B, STATE_DIM] -> logits [B, ACTION_DIM].

    Prefer policy_network_forward_t in hot loops to avoid the two relayouts.
    For tiny batches (B <= ~128) a plain fused-XLA MLP is just as fast as any
    kernel; this path is kept uniform for simplicity.
    """
    out_t = policy_network_forward_t(x.astype(jnp.float32).T, prepped,
                                     block_b=block_b)
    return out_t.T


def init_params(key):
    """PyTorch-style nn.Linear init: weights [out, in], bias [out]."""
    ks = jax.random.split(key, 6)

    def linear(kw, kb, fan_in, fan_out):
        bound = 1.0 / (fan_in ** 0.5)
        w = jax.random.uniform(kw, (fan_out, fan_in), jnp.float32, -bound, bound)
        b = jax.random.uniform(kb, (fan_out,), jnp.float32, -bound, bound)
        return w, b

    w1, b1 = linear(ks[0], ks[1], STATE_DIM, HIDDEN)
    w2, b2 = linear(ks[2], ks[3], HIDDEN, HIDDEN)
    w3, b3 = linear(ks[4], ks[5], HIDDEN, ACTION_DIM)
    return (w1, b1, w2, b2, w3, b3)


def prepare_params(params, mxu_dtype=jnp.bfloat16):
    """Lay out params for the kernel.

    Biases become [out, 1] columns (lane-broadcast inside the kernel); the
    layer-2/3 weights are optionally pre-cast to bf16 for native MXU passes
    (f32 accumulation is kept).  Pass mxu_dtype=jnp.float32 for exact
    PyTorch-f32 semantics.
    """
    w1, b1, w2, b2, w3, b3 = params
    return (w1.astype(jnp.float32),
            b1.reshape(HIDDEN, 1).astype(jnp.float32),
            w2.astype(mxu_dtype),
            b2.reshape(HIDDEN, 1).astype(jnp.float32),
            w3.astype(mxu_dtype),
            b3.reshape(ACTION_DIM, 1).astype(jnp.float32))


def reference_forward(x, params):
    w1, b1, w2, b2, w3, b3 = params
    h = jnp.maximum(x @ w1.T + b1, 0.0)
    h = jnp.maximum(h @ w2.T + b2, 0.0)
    return h @ w3.T + b3


if __name__ == "__main__":
    key = jax.random.PRNGKey(0)
    k_params, k_x1, k_x2 = jax.random.split(key, 3)

    params = init_params(k_params)
    prep_f32 = prepare_params(params, mxu_dtype=jnp.float32)
    prep_bf16 = prepare_params(params, mxu_dtype=jnp.bfloat16)   # fast path

    # Small batch (typical RL policy call): single 128-lane boundary block.
    B_small = 8
    x_small = jax.random.normal(k_x1, (B_small, STATE_DIM), jnp.float32)
    out_small = jax.block_until_ready(policy_network_forward(x_small, prep_f32))
    ref_small = reference_forward(x_small, params)
    assert out_small.shape == (B_small, ACTION_DIM)
    assert jnp.allclose(out_small, ref_small, atol=1e-5, rtol=1e-5), \
        "mismatch vs reference (small batch, f32 MXU)"

    # Larger, non-multiple batch: exercises the bucketed tile + boundary clip.
    B_big = 1000
    x_big = jax.random.normal(k_x2, (B_big, STATE_DIM), jnp.float32)
    out_big = jax.block_until_ready(policy_network_forward(x_big, prep_f32))
    ref_big = reference_forward(x_big, params)
    assert out_big.shape == (B_big, ACTION_DIM)
    assert jnp.allclose(out_big, ref_big, atol=1e-5, rtol=1e-5), \
        "mismatch vs reference (large batch, f32 MXU)"

    # bf16-MXU fast path: same kernel, pre-cast weights; looser tolerance vs
    # the f32 reference per review note (bf16 operands, f32 accumulation).
    out_bf16 = jax.block_until_ready(policy_network_forward(x_big, prep_bf16))
    assert jnp.allclose(out_bf16, ref_big, atol=1e-1, rtol=1e-1), \
        "mismatch vs reference (large batch, bf16 MXU)"

    # Transposed-native entry point (no relayouts) matches the adapter path.
    out_t = jax.block_until_ready(
        policy_network_forward_t(x_big.T, prep_bf16))
    assert out_t.shape == (ACTION_DIM, B_big)
    assert jnp.allclose(out_t.T, out_bf16, atol=0.0, rtol=0.0), \
        "transposed entry point disagrees with adapter path"

    print("KERNEL_OK")
</pallas_src>

<mosaic_0001>
module attributes {stable_mosaic.version = 11 : i64} {
  func.func @policy_mlp_kernel(%arg0: i32, %arg1: memref<3x128xf32, #tpu.memory_space<vmem>>, %arg2: memref<64x3xf32, #tpu.memory_space<vmem>>, %arg3: memref<64x1xf32, #tpu.memory_space<vmem>>, %arg4: memref<64x64xf32, #tpu.memory_space<vmem>>, %arg5: memref<64x1xf32, #tpu.memory_space<vmem>>, %arg6: memref<4x64xf32, #tpu.memory_space<vmem>>, %arg7: memref<4x1xf32, #tpu.memory_space<vmem>>, %arg8: memref<4x128xf32, #tpu.memory_space<vmem>>) attributes {dimension_semantics = [#tpu.dimension_semantics<parallel>], iteration_bounds = array<i64: 1>, scalar_prefetch = 0 : i64, scratch_operands = 0 : i64, tpu.core_type = #tpu.core_type<tc>, window_params = [{transform_indices = @transform_0, window_bounds = array<i64: 3, 128>}, {pipeline_mode = #tpu.pipeline_mode<synchronous>, transform_indices = @transform_1, window_bounds = array<i64: 64, 3>}, {pipeline_mode = #tpu.pipeline_mode<synchronous>, transform_indices = @transform_2, window_bounds = array<i64: 64, 1>}, {pipeline_mode = #tpu.pipeline_mode<synchronous>, transform_indices = @transform_3, window_bounds = array<i64: 64, 64>}, {pipeline_mode = #tpu.pipeline_mode<synchronous>, transform_indices = @transform_4, window_bounds = array<i64: 64, 1>}, {pipeline_mode = #tpu.pipeline_mode<synchronous>, transform_indices = @transform_5, window_bounds = array<i64: 4, 64>}, {pipeline_mode = #tpu.pipeline_mode<synchronous>, transform_indices = @transform_6, window_bounds = array<i64: 4, 1>}, {transform_indices = @transform_7, window_bounds = array<i64: 4, 128>}]} {
    %c0 = arith.constant 0 : index
    %c0_0 = arith.constant 0 : index
    %0 = vector.load %arg1[%c0, %c0_0] : memref<3x128xf32, #tpu.memory_space<vmem>>, vector<3x128xf32>
    %c0_1 = arith.constant 0 : index
    %c0_2 = arith.constant 0 : index
    %1 = vector.load %arg2[%c0_1, %c0_2] : memref<64x3xf32, #tpu.memory_space<vmem>>, vector<64x3xf32>
    %c0_3 = arith.constant 0 : index
    %c0_4 = arith.constant 0 : index
    %2 = vector.load %arg3[%c0_3, %c0_4] : memref<64x1xf32, #tpu.memory_space<vmem>>, vector<64x1xf32>
    %3 = vector.extract_strided_slice %1 {offsets = [0, 0], sizes = [64, 1], strides = [1, 1]} : vector<64x3xf32> to vector<64x1xf32>
    %4 = vector.extract_strided_slice %0 {offsets = [0, 0], sizes = [1, 128], strides = [1, 1]} : vector<3x128xf32> to vector<1x128xf32>
    %5 = vector.broadcast %3 : vector<64x1xf32> to vector<64x128xf32>
    %6 = vector.broadcast %4 : vector<1x128xf32> to vector<64x128xf32>
    %7 = arith.mulf %5, %6 : vector<64x128xf32>
    %8 = vector.broadcast %2 : vector<64x1xf32> to vector<64x128xf32>
    %9 = arith.addf %8, %7 : vector<64x128xf32>
    %10 = vector.extract_strided_slice %1 {offsets = [0, 1], sizes = [64, 1], strides = [1, 1]} : vector<64x3xf32> to vector<64x1xf32>
    %11 = vector.extract_strided_slice %0 {offsets = [1, 0], sizes = [1, 128], strides = [1, 1]} : vector<3x128xf32> to vector<1x128xf32>
    %12 = vector.broadcast %10 : vector<64x1xf32> to vector<64x128xf32>
    %13 = vector.broadcast %11 : vector<1x128xf32> to vector<64x128xf32>
    %14 = arith.mulf %12, %13 : vector<64x128xf32>
    %15 = arith.addf %9, %14 : vector<64x128xf32>
    %16 = vector.extract_strided_slice %1 {offsets = [0, 2], sizes = [64, 1], strides = [1, 1]} : vector<64x3xf32> to vector<64x1xf32>
    %17 = vector.extract_strided_slice %0 {offsets = [2, 0], sizes = [1, 128], strides = [1, 1]} : vector<3x128xf32> to vector<1x128xf32>
    %18 = vector.broadcast %16 : vector<64x1xf32> to vector<64x128xf32>
    %19 = vector.broadcast %17 : vector<1x128xf32> to vector<64x128xf32>
    %20 = arith.mulf %18, %19 : vector<64x128xf32>
    %21 = arith.addf %15, %20 : vector<64x128xf32>
    %cst = arith.constant 0.000000e+00 : f32
    %22 = vector.broadcast %cst : f32 to vector<64x128xf32>
    %23 = arith.maximumf %21, %22 : vector<64x128xf32>
    %c0_5 = arith.constant 0 : index
    %c0_6 = arith.constant 0 : index
    %24 = vector.load %arg4[%c0_5, %c0_6] : memref<64x64xf32, #tpu.memory_space<vmem>>, vector<64x64xf32>
    %cst_7 = arith.constant dense<0.000000e+00> : vector<64x128xf32>
    %25 = tpu.matmul %24, %23, %cst_7 {dimension_numbers = #tpu.dot_dimension_numbers<[1], [0], [0], [1], [0, 0, 1, 1], [], []>} : vector<64x64xf32>, vector<64x128xf32>, vector<64x128xf32> -> vector<64x128xf32>
    %c0_8 = arith.constant 0 : index
    %c0_9 = arith.constant 0 : index
    %26 = vector.load %arg5[%c0_8, %c0_9] : memref<64x1xf32, #tpu.memory_space<vmem>>, vector<64x1xf32>
    %27 = vector.broadcast %26 : vector<64x1xf32> to vector<64x128xf32>
    %28 = arith.addf %25, %27 : vector<64x128xf32>
    %cst_10 = arith.constant 0.000000e+00 : f32
    %29 = vector.broadcast %cst_10 : f32 to vector<64x128xf32>
    %30 = arith.maximumf %28, %29 : vector<64x128xf32>
    %c0_11 = arith.constant 0 : index
    %c0_12 = arith.constant 0 : index
    %31 = vector.load %arg6[%c0_11, %c0_12] : memref<4x64xf32, #tpu.memory_space<vmem>>, vector<4x64xf32>
    %cst_13 = arith.constant dense<0.000000e+00> : vector<4x128xf32>
    %32 = tpu.matmul %31, %30, %cst_13 {dimension_numbers = #tpu.dot_dimension_numbers<[1], [0], [0], [1], [0, 0, 1, 1], [], []>} : vector<4x64xf32>, vector<64x128xf32>, vector<4x128xf32> -> vector<4x128xf32>
    %c0_14 = arith.constant 0 : index
    %c0_15 = arith.constant 0 : index
    %33 = vector.load %arg7[%c0_14, %c0_15] : memref<4x1xf32, #tpu.memory_space<vmem>>, vector<4x1xf32>
    %34 = vector.broadcast %33 : vector<4x1xf32> to vector<4x128xf32>
    %35 = arith.addf %32, %34 : vector<4x128xf32>
    %c0_16 = arith.constant 0 : index
    %c0_17 = arith.constant 0 : index
    %36 = vector.load %arg8[%c0_16, %c0_17] : memref<4x128xf32, #tpu.memory_space<vmem>>, vector<4x128xf32>
    tpu.vector_store %arg8[%c0_16, %c0_17], %35 {strides = array<i32>} : memref<4x128xf32, #tpu.memory_space<vmem>>, vector<4x128xf32>,
    return
  }
  func.func @transform_0(%arg0: i32) -> (i32, i32) {
    %c0_i32 = arith.constant 0 : i32
    %c0_i32_0 = arith.constant 0 : i32
    return %c0_i32, %arg0 : i32, i32
  }
  func.func @transform_1(%arg0: i32) -> (i32, i32) {
    %c0_i32 = arith.constant 0 : i32
    %c0_i32_0 = arith.constant 0 : i32
    %c0_i32_1 = arith.constant 0 : i32
    return %c0_i32, %c0_i32_0 : i32, i32
  }
  func.func @transform_2(%arg0: i32) -> (i32, i32) {
    %c0_i32 = arith.constant 0 : i32
    %c0_i32_0 = arith.constant 0 : i32
    %c0_i32_1 = arith.constant 0 : i32
    return %c0_i32, %c0_i32_0 : i32, i32
  }
  func.func @transform_3(%arg0: i32) -> (i32, i32) {
    %c0_i32 = arith.constant 0 : i32
    %c0_i32_0 = arith.constant 0 : i32
    %c0_i32_1 = arith.constant 0 : i32
    return %c0_i32, %c0_i32_0 : i32, i32
  }
  func.func @transform_4(%arg0: i32) -> (i32, i32) {
    %c0_i32 = arith.constant 0 : i32
    %c0_i32_0 = arith.constant 0 : i32
    %c0_i32_1 = arith.constant 0 : i32
    return %c0_i32, %c0_i32_0 : i32, i32
  }
  func.func @transform_5(%arg0: i32) -> (i32, i32) {
    %c0_i32 = arith.constant 0 : i32
    %c0_i32_0 = arith.constant 0 : i32
    %c0_i32_1 = arith.constant 0 : i32
    return %c0_i32, %c0_i32_0 : i32, i32
  }
  func.func @transform_6(%arg0: i32) -> (i32, i32) {
    %c0_i32 = arith.constant 0 : i32
    %c0_i32_0 = arith.constant 0 : i32
    %c0_i32_1 = arith.constant 0 : i32
    return %c0_i32, %c0_i32_0 : i32, i32
  }
  func.func @transform_7(%arg0: i32) -> (i32, i32) {
    %c0_i32 = arith.constant 0 : i32
    %c0_i32_0 = arith.constant 0 : i32
    return %c0_i32, %arg0 : i32, i32
  }
}

</mosaic_0001>

<llo_original>
// kernel: tpu_custom_call.1
$region0: #{tpu_custom_call.1}
  #allocation0 [shape = 'u32[]', space=smem, size = 0x4, offset = 0x4, fixed_abs, tag = 'smem constant byte address 0x4 - core index']
  #allocation1 [shape = 'u32[144,128]{1,0:T(1,128)}', space=vmem, size = 0x12000, scoped, tag = 'internal scratch']
  %s0 = inlined_call_operand.vmem [shape: f32[3,8], index: 0, kind: input, shape index: {}]
  %s1 = inlined_call_operand.vmem [shape: f32[64,3], index: 1, kind: input, shape index: {}]
  %s2 = inlined_call_operand.vmem [shape: f32[64,1], index: 2, kind: input, shape index: {}]
  %s3 = inlined_call_operand.vmem [shape: f32[64,64], index: 3, kind: input, shape index: {}]
  %s4 = inlined_call_operand.vmem [shape: f32[64,1], index: 4, kind: input, shape index: {}]
  %s5 = inlined_call_operand.vmem [shape: f32[4,64], index: 5, kind: input, shape index: {}]
  %s6 = inlined_call_operand.vmem [shape: f32[4,1], index: 6, kind: input, shape index: {}]
  %s7 = inlined_call_operand.hbm [shape: f32[4,8], index: 7, kind: output, shape index: {}]
  %s8 = sld [smem:[#allocation0]]
  $region38: #{tpu_custom_call.1} parent=0
    _
  %s10 = ssub.s32 1, %s8
  %s11 = scalar_select 0, %s10, %s8
  $region1: #{tpu_custom_call.1} parent=0
    #allocation2 [shape = 'u8[2048]{0}', space=vmem, size = 0x800, scoped, tag = 'output window, operand 0, single buffered']
    #allocation3 [shape = 's32[1]{0}', space=sflag, size = 0x4, scoped, tag = 'scoped memory for tpu_custom_call.1']
    %12 = vsyncpa [#allocation3], 0
    // Predicated region
    $region2: #{tpu_custom_call.1} parent=1 // pred_check
      _
    $region3: #{tpu_custom_call.1} parent=1 // pred_check_branch
      %14 = sbr.rel (0) target = $region5
    $region4: #{tpu_custom_call.1} parent=1 // pred_region
      _
    $region5: #{tpu_custom_call.1} parent=1 // pred_fallthru
      _
    // Predicated region
    $region6: #{tpu_custom_call.1} parent=1 // pred_check
      _
    $region7: #{tpu_custom_call.1} parent=1 // pred_check_branch
      %16 = sbr.rel (0) target = $region9
    $region8: #{tpu_custom_call.1} parent=1 // pred_region
      _
    $region9: #{tpu_custom_call.1} parent=1 // pred_fallthru
      _
    // Predicated region
    $region10: #{tpu_custom_call.1} parent=1 // pred_check
      _
    $region11: #{tpu_custom_call.1} parent=1 // pred_check_branch
      %18 = sbr.rel (0) target = $region13
    $region12: #{tpu_custom_call.1} parent=1 // pred_region
      _
    $region13: #{tpu_custom_call.1} parent=1 // pred_fallthru
      _
    // Predicated region
    $region14: #{tpu_custom_call.1} parent=1 // pred_check
      _
    $region15: #{tpu_custom_call.1} parent=1 // pred_check_branch
      %20 = sbr.rel (0) target = $region17
    $region16: #{tpu_custom_call.1} parent=1 // pred_region
      _
    $region17: #{tpu_custom_call.1} parent=1 // pred_fallthru
      _
    // Predicated region
    $region18: #{tpu_custom_call.1} parent=1 // pred_check
      _
    $region19: #{tpu_custom_call.1} parent=1 // pred_check_branch
      %22 = sbr.rel (0) target = $region21
    $region20: #{tpu_custom_call.1} parent=1 // pred_region
      _
    $region21: #{tpu_custom_call.1} parent=1 // pred_fallthru
      _
    // Predicated region
    $region22: #{tpu_custom_call.1} parent=1 // pred_check
      _
    $region23: #{tpu_custom_call.1} parent=1 // pred_check_branch
      %24 = sbr.rel (0) target = $region25
    $region24: #{tpu_custom_call.1} parent=1 // pred_region
      _
    $region25: #{tpu_custom_call.1} parent=1 // pred_fallthru
      _
    // Predicated region
    $region26: #{tpu_custom_call.1} parent=1 // pred_check
      _
    $region27: #{tpu_custom_call.1} parent=1 // pred_check_branch
      %26 = sbr.rel (0) target = $region29
    $region28: #{tpu_custom_call.1} parent=1 // pred_region
      _
    $region29: #{tpu_custom_call.1} parent=1 // pred_fallthru
      _
    %v27 = vld [vmem:[%s0] sm:$0x7]
    %v28 = vld [vmem:[%s1] sm:$0xff]
    %v29 = vld [vmem:[%s1 + $0x8] sm:$0xff]
    %v30 = vld [vmem:[%s1 + $0x10] sm:$0xff]
    %v31 = vld [vmem:[%s1 + $0x18] sm:$0xff]
    %v32 = vld [vmem:[%s1 + $0x20] sm:$0xff]
    %v33 = vld [vmem:[%s1 + $0x28] sm:$0xff]
    %v34 = vld [vmem:[%s1 + $0x30] sm:$0xff]
    %v35 = vld [vmem:[%s1 + $0x38] sm:$0xff]
    %v36 = vld [vmem:[%s2] sm:$0xff]
    %v37 = vld [vmem:[%s2 + $0x8] sm:$0xff]
    %v38 = vld [vmem:[%s2 + $0x10] sm:$0xff]
    %v39 = vld [vmem:[%s2 + $0x18] sm:$0xff]
    %v40 = vld [vmem:[%s2 + $0x20] sm:$0xff]
    %v41 = vld [vmem:[%s2 + $0x28] sm:$0xff]
    %v42 = vld [vmem:[%s2 + $0x30] sm:$0xff]
    %v43 = vld [vmem:[%s2 + $0x38] sm:$0xff]
    %45 = vset.pattern.permute.xlu0 0
    %46 = vperm.xlu0 %45, %v28
    %v47 = vpop.permute.xlu0 %46
    %50 = vset.pattern.permute.xlu0 0
    %51 = vperm.xlu0 %50, %v29
    %v52 = vpop.permute.xlu0 %51
    %55 = vset.pattern.permute.xlu0 0
    %56 = vperm.xlu0 %55, %v30
    %v57 = vpop.permute.xlu0 %56
    %60 = vset.pattern.permute.xlu0 0
    %61 = vperm.xlu0 %60, %v31
    %v62 = vpop.permute.xlu0 %61
    %65 = vset.pattern.permute.xlu0 0
    %66 = vperm.xlu0 %65, %v32
    %v67 = vpop.permute.xlu0 %66
    %70 = vset.pattern.permute.xlu0 0
    %71 = vperm.xlu0 %70, %v33
    %v72 = vpop.permute.xlu0 %71
    %75 = vset.pattern.permute.xlu0 0
    %76 = vperm.xlu0 %75, %v34
    %v77 = vpop.permute.xlu0 %76
    %80 = vset.pattern.permute.xlu0 0
    %81 = vperm.xlu0 %80, %v35
    %v82 = vpop.permute.xlu0 %81
    %v84 = vlaneseq
    %v85 = vshrl.u32 %v84, 7
    %v86 = vsub.s32 0, %v85
    %v87 = vrot.slane %v27, %v86
    %v88 = vmul.f32 %v47, %v87
    %v89 = vmul.f32 %v52, %v87
    %v90 = vmul.f32 %v57, %v87
    %v91 = vmul.f32 %v62, %v87
    %v92 = vmul.f32 %v67, %v87
    %v93 = vmul.f32 %v72, %v87
    %v94 = vmul.f32 %v77, %v87
    %v95 = vmul.f32 %v82, %v87
    %97 = vset.pattern.permute.xlu0 0
    %98 = vperm.xlu0 %97, %v36
    %v99 = vpop.permute.xlu0 %98
    %102 = vset.pattern.permute.xlu0 0
    %103 = vperm.xlu0 %102, %v37
    %v104 = vpop.permute.xlu0 %103
    %107 = vset.pattern.permute.xlu0 0
    %108 = vperm.xlu0 %107, %v38
    %v109 = vpop.permute.xlu0 %108
    %112 = vset.pattern.permute.xlu0 0
    %113 = vperm.xlu0 %112, %v39
    %v114 = vpop.permute.xlu0 %113
    %117 = vset.pattern.permute.xlu0 0
    %118 = vperm.xlu0 %117, %v40
    %v119 = vpop.permute.xlu0 %118
    %122 = vset.pattern.permute.xlu0 0
    %123 = vperm.xlu0 %122, %v41
    %v124 = vpop.permute.xlu0 %123
    %127 = vset.pattern.permute.xlu0 0
    %128 = vperm.xlu0 %127, %v42
    %v129 = vpop.permute.xlu0 %128
    %132 = vset.pattern.permute.xlu0 0
    %133 = vperm.xlu0 %132, %v43
    %v134 = vpop.permute.xlu0 %133
    %v136 = vadd.f32 %v99, %v88
    %v137 = vadd.f32 %v104, %v89
    %v138 = vadd.f32 %v109, %v90
    %v139 = vadd.f32 %v114, %v91
    %v140 = vadd.f32 %v119, %v92
    %v141 = vadd.f32 %v124, %v93
    %v142 = vadd.f32 %v129, %v94
    %v143 = vadd.f32 %v134, %v95
    %144 = vset.pattern.permute.xlu0 1
    %145 = vperm.xlu0 %144, %v28
    %v146 = vpop.permute.xlu0 %145
    %148 = vset.pattern.permute.xlu0 1
    %149 = vperm.xlu0 %148, %v29
    %v150 = vpop.permute.xlu0 %149
    %152 = vset.pattern.permute.xlu0 1
    %153 = vperm.xlu0 %152, %v30
    %v154 = vpop.permute.xlu0 %153
    %156 = vset.pattern.permute.xlu0 1
    %157 = vperm.xlu0 %156, %v31
    %v158 = vpop.permute.xlu0 %157
    %160 = vset.pattern.permute.xlu0 1
    %161 = vperm.xlu0 %160, %v32
    %v162 = vpop.permute.xlu0 %161
    %164 = vset.pattern.permute.xlu0 1
    %165 = vperm.xlu0 %164, %v33
    %v166 = vpop.permute.xlu0 %165
    %168 = vset.pattern.permute.xlu0 1
    %169 = vperm.xlu0 %168, %v34
    %v170 = vpop.permute.xlu0 %169
    %172 = vset.pattern.permute.xlu0 1
    %173 = vperm.xlu0 %172, %v35
    %v174 = vpop.permute.xlu0 %173
    %v176 = vlaneseq
    %v177 = vshrl.u32 %v176, 7
    %v178 = vsub.s32 1, %v177
    %v179 = vrot.slane %v27, %v178
    %v180 = vmul.f32 %v146, %v179
    %v181 = vmul.f32 %v150, %v179
    %v182 = vmul.f32 %v154, %v179
    %v183 = vmul.f32 %v158, %v179
    %v184 = vmul.f32 %v162, %v179
    %v185 = vmul.f32 %v166, %v179
    %v186 = vmul.f32 %v170, %v179
    %v187 = vmul.f32 %v174, %v179
    %v188 = vadd.f32 %v136, %v180
    %v189 = vadd.f32 %v137, %v181
    %v190 = vadd.f32 %v138, %v182
    %v191 = vadd.f32 %v139, %v183
    %v192 = vadd.f32 %v140, %v184
    %v193 = vadd.f32 %v141, %v185
    %v194 = vadd.f32 %v142, %v186
    %v195 = vadd.f32 %v143, %v187
    %196 = vset.pattern.permute.xlu0 2
    %197 = vperm.xlu0 %196, %v28
    %v198 = vpop.permute.xlu0 %197
    %200 = vset.pattern.permute.xlu0 2
    %201 = vperm.xlu0 %200, %v29
    %v202 = vpop.permute.xlu0 %201
    %204 = vset.pattern.permute.xlu0 2
    %205 = vperm.xlu0 %204, %v30
    %v206 = vpop.permute.xlu0 %205
    %208 = vset.pattern.permute.xlu0 2
    %209 = vperm.xlu0 %208, %v31
    %v210 = vpop.permute.xlu0 %209
    %212 = vset.pattern.permute.xlu0 2
    %213 = vperm.xlu0 %212, %v32
    %v214 = vpop.permute.xlu0 %213
    %216 = vset.pattern.permute.xlu0 2
    %217 = vperm.xlu0 %216, %v33
    %v218 = vpop.permute.xlu0 %217
    %220 = vset.pattern.permute.xlu0 2
    %221 = vperm.xlu0 %220, %v34
    %v222 = vpop.permute.xlu0 %221
    %224 = vset.pattern.permute.xlu0 2
    %225 = vperm.xlu0 %224, %v35
    %v226 = vpop.permute.xlu0 %225
    %v228 = vlaneseq
    %v229 = vshrl.u32 %v228, 7
    %v230 = vsub.s32 2, %v229
    %v231 = vrot.slane %v27, %v230
    %v232 = vmul.f32 %v198, %v231
    %v233 = vmul.f32 %v202, %v231
    %v234 = vmul.f32 %v206, %v231
    %v235 = vmul.f32 %v210, %v231
    %v236 = vmul.f32 %v214, %v231
    %v237 = vmul.f32 %v218, %v231
    %v238 = vmul.f32 %v222, %v231
    %v239 = vmul.f32 %v226, %v231
    %v240 = vadd.f32 %v188, %v232
    %v241 = vadd.f32 %v189, %v233
    %v242 = vadd.f32 %v190, %v234
    %v243 = vadd.f32 %v191, %v235
    %v244 = vadd.f32 %v192, %v236
    %v245 = vadd.f32 %v193, %v237
    %v246 = vadd.f32 %v194, %v238
    %v247 = vadd.f32 %v195, %v239
    %v248 = vmax.f32 %v240, 0.0
    %v249 = vmax.f32 %v241, 0.0
    %v250 = vmax.f32 %v242, 0.0
    %v251 = vmax.f32 %v243, 0.0
    %v252 = vmax.f32 %v244, 0.0
    %v253 = vmax.f32 %v245, 0.0
    %v254 = vmax.f32 %v246, 0.0
    %v255 = vmax.f32 %v247, 0.0
    %v256 = vld [vmem:[%s3] sm:$0xff]
    %v257 = vld [vmem:[%s3 + $0x8] sm:$0xff]
    %v258 = vld [vmem:[%s3 + $0x10] sm:$0xff]
    %v259 = vld [vmem:[%s3 + $0x18] sm:$0xff]
    %v260 = vld [vmem:[%s3 + $0x20] sm:$0xff]
    %v261 = vld [vmem:[%s3 + $0x28] sm:$0xff]
    %v262 = vld [vmem:[%s3 + $0x30] sm:$0xff]
    %v263 = vld [vmem:[%s3 + $0x38] sm:$0xff]
    %v264 = vld [vmem:[%s4] sm:$0xff]
    %v265 = vld [vmem:[%s4 + $0x8] sm:$0xff]
    %v266 = vld [vmem:[%s4 + $0x10] sm:$0xff]
    %v267 = vld [vmem:[%s4 + $0x18] sm:$0xff]
    %v268 = vld [vmem:[%s4 + $0x20] sm:$0xff]
    %v269 = vld [vmem:[%s4 + $0x28] sm:$0xff]
    %v270 = vld [vmem:[%s4 + $0x30] sm:$0xff]
    %v271 = vld [vmem:[%s4 + $0x38] sm:$0xff]
    %273 = vset.pattern.permute.xlu0 0
    %274 = vperm.xlu0 %273, %v264
    %v275 = vpop.permute.xlu0 %274
    %278 = vset.pattern.permute.xlu0 0
    %279 = vperm.xlu0 %278, %v265
    %v280 = vpop.permute.xlu0 %279
    %283 = vset.pattern.permute.xlu0 0
    %284 = vperm.xlu0 %283, %v266
    %v285 = vpop.permute.xlu0 %284
    %288 = vset.pattern.permute.xlu0 0
    %289 = vperm.xlu0 %288, %v267
    %v290 = vpop.permute.xlu0 %289
    %293 = vset.pattern.permute.xlu0 0
    %294 = vperm.xlu0 %293, %v268
    %v295 = vpop.permute.xlu0 %294
    %298 = vset.pattern.permute.xlu0 0
    %299 = vperm.xlu0 %298, %v269
    %v300 = vpop.permute.xlu0 %299
    %303 = vset.pattern.permute.xlu0 0
    %304 = vperm.xlu0 %303, %v270
    %v305 = vpop.permute.xlu0 %304
    %308 = vset.pattern.permute.xlu0 0
    %309 = vperm.xlu0 %308, %v271
    %v310 = vpop.permute.xlu0 %309
    %vm312 = vcmask 523264
    %v314 = vsel %vm312, %v256, 0
    %v317 = vsel %vm312, %v257, 0
    %v320 = vsel %vm312, %v258, 0
    %v323 = vsel %vm312, %v259, 0
    %v326 = vsel %vm312, %v260, 0
    %v329 = vsel %vm312, %v261, 0
    %v332 = vsel %vm312, %v262, 0
    %v335 = vsel %vm312, %v263, 0
    %337 = vmatprep.subr.mxu0 0.0
    %338 = vmatpush1.msra.mxu0 %v248
    %339 = vmatprep.subr.mxu0 0.0
    %340 = vmatpush1.msra.mxu0 %v249
    %341 = vmatprep.subr.mxu0 0.0
    %342 = vmatpush1.msra.mxu0 %v250
    %343 = vmatprep.subr.mxu0 0.0
    %344 = vmatpush1.msra.mxu0 %v251
    %345 = vmatprep.subr.mxu0 0.0
    %346 = vmatpush1.msra.mxu0 %v252
    %347 = vmatprep.subr.mxu0 0.0
    %348 = vmatpush1.msra.mxu0 %v253
    %349 = vmatprep.subr.mxu0 0.0
    %350 = vmatpush1.msra.mxu0 %v254
    %351 = vmatprep.subr.mxu0 0.0
    %352 = vmatpush1.msra.mxu0 %v255
    %353 = vmatprep.subr.mxu0 0.0
    %354 = vmatpush1.msra.mxu0 0.0
    %355 = vmatprep.subr.mxu0 0.0
    %356 = vmatpush1.msra.mxu0 0.0
    %357 = vmatprep.subr.mxu0 0.0
    %358 = vmatpush1.msra.mxu0 0.0
    %359 = vmatprep.subr.mxu0 0.0
    %360 = vmatpush1.msra.mxu0 0.0
    %361 = vmatprep.subr.mxu0 0.0
    %362 = vmatpush1.msra.mxu0 0.0
    %363 = vmatprep.subr.mxu0 0.0
    %364 = vmatpush1.msra.mxu0 0.0
    %365 = vmatprep.subr.mxu0 0.0
    %366 = vmatpush1.msra.mxu0 0.0
    %367 = vmatprep.subr.mxu0 0.0
    %368 = vmatpush1.msra.mxu0 0.0
    %369 = vmatprep.subr.mxu0 0.0
    %370 = vmatpush1.msra.mxu0 0.0
    %371 = vmatprep.subr.mxu0 0.0
    %372 = vmatpush1.msra.mxu0 0.0
    %373 = vmatprep.subr.mxu0 0.0
    %374 = vmatpush1.msra.mxu0 0.0
    %375 = vmatprep.subr.mxu0 0.0
    %376 = vmatpush1.msra.mxu0 0.0
    %377 = vmatprep.subr.mxu0 0.0
    %378 = vmatpush1.msra.mxu0 0.0
    %379 = vmatprep.subr.mxu0 0.0
    %380 = vmatpush1.msra.mxu0 0.0
    %381 = vmatprep.subr.mxu0 0.0
    %382 = vmatpush1.msra.mxu0 0.0
    %383 = vmatprep.subr.mxu0 0.0
    %384 = vmatpush1.msra.mxu0 0.0
    %385 = vmatprep.subr.mxu0 0.0
    %386 = vmatpush1.msra.mxu0 0.0
    %387 = vmatprep.subr.mxu0 0.0
    %388 = vmatpush1.msra.mxu0 0.0
    %389 = vmatprep.subr.mxu0 0.0
    %390 = vmatpush1.msra.mxu0 0.0
    %391 = vmatprep.subr.mxu0 0.0
    %392 = vmatpush1.msra.mxu0 0.0
    %393 = vmatprep.subr.mxu0 0.0
    %394 = vmatpush1.msra.mxu0 0.0
    %395 = vmatprep.subr.mxu0 0.0
    %396 = vmatpush1.msra.mxu0 0.0
    %397 = vmatprep.subr.mxu0 0.0
    %398 = vmatpush1.msra.mxu0 0.0
    %399 = vmatprep.subr.mxu0 0.0
    %400 = vmatpush1.msra.mxu0 0.0
    %401 = vmatprep.mubr.f32.mxu0 0.0
    %402 = vmatmul.mubr.f32.gmra.mrb[0].mxu0 %v314
    %v403 = vpop.f32.mrb[0].mxu0
    %v404 = vadd.f32 %v275, %v403
    %v405 = vpop.f32.mrb[0].mxu0
    %406 = vmatprep.mubr.f32.mxu0 0.0
    %407 = vmatmul.mubr.f32.gmra.mrb[0].mxu0 %v317
    %v408 = vpop.f32.mrb[0].mxu0
    %v409 = vadd.f32 %v280, %v408
    %v410 = vpop.f32.mrb[0].mxu0
    %411 = vmatprep.mubr.f32.mxu0 0.0
    %412 = vmatmul.mubr.f32.gmra.mrb[0].mxu0 %v320
    %v413 = vpop.f32.mrb[0].mxu0
    %v414 = vadd.f32 %v285, %v413
    %v415 = vpop.f32.mrb[0].mxu0
    %416 = vmatprep.mubr.f32.mxu0 0.0
    %417 = vmatmul.mubr.f32.gmra.mrb[0].mxu0 %v323
    %v418 = vpop.f32.mrb[0].mxu0
    %v419 = vadd.f32 %v290, %v418
    %v420 = vpop.f32.mrb[0].mxu0
    %421 = vmatprep.mubr.f32.mxu0 0.0
    %422 = vmatmul.mubr.f32.gmra.mrb[0].mxu0 %v326
    %v423 = vpop.f32.mrb[0].mxu0
    %v424 = vadd.f32 %v295, %v423
    %v425 = vpop.f32.mrb[0].mxu0
    %426 = vmatprep.mubr.f32.mxu0 0.0
    %427 = vmatmul.mubr.f32.gmra.mrb[0].mxu0 %v329
    %v428 = vpop.f32.mrb[0].mxu0
    %v429 = vadd.f32 %v300, %v428
    %v430 = vpop.f32.mrb[0].mxu0
    %431 = vmatprep.mubr.f32.mxu0 0.0
    %432 = vmatmul.mubr.f32.gmra.mrb[0].mxu0 %v332
    %v433 = vpop.f32.mrb[0].mxu0
    %v434 = vadd.f32 %v305, %v433
    %v435 = vpop.f32.mrb[0].mxu0
    %436 = vmatprep.mubr.f32.mxu0 0.0
    %437 = vmatmul.mubr.f32.gmra.mrb[0].mxu0 %v335
    %v438 = vpop.f32.mrb[0].mxu0
    %v439 = vadd.f32 %v310, %v438
    %v440 = vpop.f32.mrb[0].mxu0
    %441 = vdwg.mxu0
    %v442 = vmax.f32 %v404, 0.0
    %v443 = vmax.f32 %v409, 0.0
    %v444 = vmax.f32 %v414, 0.0
    %v445 = vmax.f32 %v419, 0.0
    %v446 = vmax.f32 %v424, 0.0
    %v447 = vmax.f32 %v429, 0.0
    %v448 = vmax.f32 %v434, 0.0
    %v449 = vmax.f32 %v439, 0.0
    %v450 = vld [vmem:[%s5] sm:$0xf]
    %v451 = vld [vmem:[%s6] sm:$0xf]
    %453 = vset.pattern.permute.xlu0 0
    %454 = vperm.xlu0 %453, %v451
    %v455 = vpop.permute.xlu0 %454
    %v458 = vsel %vm312, %v450, 0
    %460 = vmatprep.subr.mxu0 0.0
    %461 = vmatpush1.msra.mxu0 %v442
    %462 = vmatprep.subr.mxu0 0.0
    %463 = vmatpush1.msra.mxu0 %v443
    %464 = vmatprep.subr.mxu0 0.0
    %465 = vmatpush1.msra.mxu0 %v444
    %466 = vmatprep.subr.mxu0 0.0
    %467 = vmatpush1.msra.mxu0 %v445
    %468 = vmatprep.subr.mxu0 0.0
    %469 = vmatpush1.msra.mxu0 %v446
    %470 = vmatprep.subr.mxu0 0.0
    %471 = vmatpush1.msra.mxu0 %v447
    %472 = vmatprep.subr.mxu0 0.0
    %473 = vmatpush1.msra.mxu0 %v448
    %474 = vmatprep.subr.mxu0 0.0
    %475 = vmatpush1.msra.mxu0 %v449
    %476 = vmatprep.subr.mxu0 0.0
    %477 = vmatpush1.msra.mxu0 0.0
    %478 = vmatprep.subr.mxu0 0.0
    %479 = vmatpush1.msra.mxu0 0.0
    %480 = vmatprep.subr.mxu0 0.0
    %481 = vmatpush1.msra.mxu0 0.0
    %482 = vmatprep.subr.mxu0 0.0
    %483 = vmatpush1.msra.mxu0 0.0
    %484 = vmatprep.subr.mxu0 0.0
    %485 = vmatpush1.msra.mxu0 0.0
    %486 = vmatprep.subr.mxu0 0.0
    %487 = vmatpush1.msra.mxu0 0.0
    %488 = vmatprep.subr.mxu0 0.0
    %489 = vmatpush1.msra.mxu0 0.0
    %490 = vmatprep.subr.mxu0 0.0
    %491 = vmatpush1.msra.mxu0 0.0
    %492 = vmatprep.subr.mxu0 0.0
    %493 = vmatpush1.msra.mxu0 0.0
    %494 = vmatprep.subr.mxu0 0.0
    %495 = vmatpush1.msra.mxu0 0.0
    %496 = vmatprep.subr.mxu0 0.0
    %497 = vmatpush1.msra.mxu0 0.0
    %498 = vmatprep.subr.mxu0 0.0
    %499 = vmatpush1.msra.mxu0 0.0
    %500 = vmatprep.subr.mxu0 0.0
    %501 = vmatpush1.msra.mxu0 0.0
    %502 = vmatprep.subr.mxu0 0.0
    %503 = vmatpush1.msra.mxu0 0.0
    %504 = vmatprep.subr.mxu0 0.0
    %505 = vmatpush1.msra.mxu0 0.0
    %506 = vmatprep.subr.mxu0 0.0
    %507 = vmatpush1.msra.mxu0 0.0
    %508 = vmatprep.subr.mxu0 0.0
    %509 = vmatpush1.msra.mxu0 0.0
    %510 = vmatprep.subr.mxu0 0.0
    %511 = vmatpush1.msra.mxu0 0.0
    %512 = vmatprep.subr.mxu0 0.0
    %513 = vmatpush1.msra.mxu0 0.0
    %514 = vmatprep.subr.mxu0 0.0
    %515 = vmatpush1.msra.mxu0 0.0
    %516 = vmatprep.subr.mxu0 0.0
    %517 = vmatpush1.msra.mxu0 0.0
    %518 = vmatprep.subr.mxu0 0.0
    %519 = vmatpush1.msra.mxu0 0.0
    %520 = vmatprep.subr.mxu0 0.0
    %521 = vmatpush1.msra.mxu0 0.0
    %522 = vmatprep.subr.mxu0 0.0
    %523 = vmatpush1.msra.mxu0 0.0
    %524 = vmatprep.mubr.f32.mxu0 0.0
    %525 = vmatmul.mubr.f32.gmra.mrb[0].mxu0 %v458
    %v526 = vpop.f32.mrb[0].mxu0
    %v527 = vadd.f32 %v455, %v526
    %v528 = vpop.f32.mrb[0].mxu0
    %529 = vdwg.mxu0
    %530 = vst [vmem:[#allocation2] sm:$0xf] %v527
    // Predicated region
    $region30: #{tpu_custom_call.1} parent=1 // pred_check
      _
    $region31: #{tpu_custom_call.1} parent=1 // pred_check_branch
      %532 = sbr.rel (0) target = $region33
    $region32: #{tpu_custom_call.1} parent=1 // pred_region
      %s534 = ssub.s32 64, 64
      %535 = vsyncadd [#allocation3], %s534
      %s537 = sshll.u32 [#allocation2], 4
      %s538 = int_to_ptr.vmem [resolvable:$true] %s537
      %540 = dma.vmem_to_hbm [thread:$0]  %s538, 64, %s7, [#allocation3]
    $region33: #{tpu_custom_call.1} parent=1 // pred_fallthru
      _
    // Predicated region
    $region34: #{tpu_custom_call.1} parent=1 // pred_check
      _
    $region35: #{tpu_custom_call.1} parent=1 // pred_check_branch
      %542 = sbr.rel (0) target = $region37
    $region36: #{tpu_custom_call.1} parent=1 // pred_region
      %543 = dma.done [#allocation3], 64
    $region37: #{tpu_custom_call.1} parent=1 // pred_fallthru
      _
    %544 = vsyncpa [#allocation3], 1

</llo_original>
